<compile_context>
chip_gen: v6e
topology: v6e:2x2x1
jax: 0.10.0
libtpu: 0.0.40
codegen_flags: <defaults>
</compile_context>

<pallas_src>
import functools

import jax
import jax.numpy as jnp
from jax import lax
from jax.experimental import pallas as pl
from jax.experimental.pallas import tpu as pltpu

BN_EPS = 1e-5


def _round_up(x, m):
    return (x + m - 1) // m * m


def _vmem_capacity_bytes():
    try:
        return int(pltpu.get_tpu_info().vmem_capacity_bytes)
    except Exception:
        return 64 * 1024 * 1024  # conservative (v7x per-TensorCore VMEM)


def _choose_row_tile(B, Ho, Wo, Cin, C_pad, in_isz, y_isz, budget):
    """Largest output-row tile whose double-buffered footprint fits the VMEM budget."""
    k_lane = _round_up(5 * Cin, 128)

    def vmem_need(th):
        n_in = _round_up((th + 2) * Wo, 16)
        n_out = _round_up(th * Wo, 16)
        q = 2 * 2 * n_in * k_lane * in_isz                    # 2 parity streams, dbl-buffered
        w = 2 * 5 * _round_up(5 * Cin, 16) * C_pad * in_isz   # resident weights
        y = 2 * n_out * C_pad * y_isz                         # dbl-buffered output
        acc = n_out * C_pad * 4 + n_out * k_lane * 4          # f32 accumulator + live lhs
        return q + w + y + acc + (2 << 20)                    # slack

    th = max(Ho, 1)
    while th > 1 and vmem_need(th) > budget:
        th = (th + 1) // 2
    # v7x: make sure the 'parallel' grid has >= 2 steps so both TensorCores get work.
    if B * (-(-Ho // th)) < 2 and Ho >= 2:
        th = -(-Ho // 2)
    return th


def _conv_relu_stats_kernel(q0_ref, q1_ref, w_ref, b_ref, y_ref, stats_ref, *,
                            tile_rows, wo):
    # q0_ref/q1_ref: ((tile_rows+2)*Wo, 5*Cin)  width-im2col'd row-parity input streams
    # w_ref:         (5, 5*Cin, C_pad)          per-kernel-row weights
    # b_ref:         (1, C_pad)                 conv bias (f32)
    # y_ref:         (tile_rows*Wo, C_pad)      conv+ReLU output for this (batch, row-tile)
    # stats_ref:     (2, C_pad)                 per-tile [sum; sum-of-squares] of y (f32)
    n = tile_rows * wo
    acc = None
    for i in range(5):                       # 5 kernel rows; parity picks the stream,
        q_ref = q0_ref if i % 2 == 0 else q1_ref
        lhs = q_ref[pl.ds((i // 2) * wo, n), :]    # contiguous row-shifted window
        part = jnp.dot(lhs, w_ref[i], preferred_element_type=jnp.float32)  # MXU, f32 acc
        acc = part if acc is None else acc + part
    y = jnp.maximum(acc + b_ref[...], 0.0)   # bias + ReLU on the VPU, f32
    y_ref[...] = y.astype(y_ref.dtype)
    # BN partial stats from the f32 value (before any bf16 cast); direct row stores.
    stats_ref[pl.ds(0, 1), :] = jnp.sum(y, axis=0, keepdims=True)
    stats_ref[pl.ds(1, 1), :] = jnp.sum(y * y, axis=0, keepdims=True)


def reduction_cell(x, weight, bias, gamma, beta, *,
                   compute_dtype=jnp.bfloat16, y_dtype=jnp.bfloat16):
    """x: (B, Cin, H, W) NCHW.  weight: (Cout, Cin, 5, 5).  Returns (B, Cout, Ho, Wo) f32."""
    B, Cin, H, W = x.shape
    Cout = weight.shape[0]
    Ho = (H + 4 - 5) // 2 + 1
    Wo = (W + 4 - 5) // 2 + 1
    Hp2 = Ho + 2

    # Lane-dense output channels; 256-granular when large (v6e/v7x 2x256^2 MXU).
    C_pad = _round_up(Cout, 256 if Cout > 128 else 128)

    in_isz = jnp.dtype(compute_dtype).itemsize
    y_isz = jnp.dtype(y_dtype).itemsize
    vmem_limit = min(int(_vmem_capacity_bytes() * 0.75), 96 * 1024 * 1024)
    th = _choose_row_tile(B, Ho, Wo, Cin, C_pad, in_isz, y_isz,
                          budget=vmem_limit - (4 << 20))
    T = -(-Ho // th)

    # ---- wrapper-side layout prep (fused strided slices, ~2.5x input bytes total) ----
    Hpad, Wpad = 2 * Hp2, 2 * Wo + 4
    x_nhwc = jnp.transpose(x, (0, 2, 3, 1))
    xp = jnp.pad(x_nhwc, ((0, 0), (2, Hpad - H - 2), (2, Wpad - W - 2), (0, 0)))

    def width_taps(pi):
        # [b, h, c, j*Cin + cin] = xp[b, 2h+pi, 2c+j, cin]
        taps = jnp.stack([xp[:, pi::2, j:j + 2 * Wo:2, :] for j in range(5)], axis=3)
        return taps.reshape(B, Hp2, Wo, 5 * Cin)

    q = [width_taps(0), width_taps(1)]
    rows_needed = T * th + 2
    if rows_needed > Hp2:
        q = [jnp.pad(a, ((0, 0), (0, rows_needed - Hp2), (0, 0), (0, 0))) for a in q]

    def blockify(a):
        # Row tiles with a 2-row halo (tiny duplication), flattened (rows, W) -> rows.
        blk = jnp.stack([a[:, t * th: t * th + th + 2] for t in range(T)], axis=1)
        return blk.reshape(B, T, (th + 2) * Wo, 5 * Cin).astype(compute_dtype)

    q0, q1 = blockify(q[0]), blockify(q[1])

    # weight (Cout, Cin, 5, 5) -> (kernel_row i, j*Cin+cin, Cout_pad)
    w_taps = jnp.transpose(weight, (2, 3, 1, 0)).reshape(5, 5 * Cin, Cout)
    w_taps = jnp.pad(w_taps, ((0, 0), (0, 0), (0, C_pad - Cout))).astype(compute_dtype)
    b2d = jnp.pad(bias.astype(jnp.float32).reshape(1, Cout), ((0, 0), (0, C_pad - Cout)))

    kernel = functools.partial(_conv_relu_stats_kernel, tile_rows=th, wo=Wo)
    flops = 2 * B * T * th * Wo * (25 * Cin) * C_pad
    bytes_accessed = (2 * B * T * (th + 2) * Wo * 5 * Cin * in_isz
                      + 25 * Cin * C_pad * in_isz
                      + B * T * th * Wo * C_pad * y_isz
                      + B * T * 2 * C_pad * 4)

    y, stats = pl.pallas_call(
        kernel,
        out_shape=(jax.ShapeDtypeStruct((B, T, th * Wo, C_pad), y_dtype),
                   jax.ShapeDtypeStruct((B, T, 2, C_pad), jnp.float32)),
        grid=(B, T),
        in_specs=[
            pl.BlockSpec((None, None, (th + 2) * Wo, 5 * Cin), lambda b, t: (b, t, 0, 0)),
            pl.BlockSpec((None, None, (th + 2) * Wo, 5 * Cin), lambda b, t: (b, t, 0, 0)),
            pl.BlockSpec((5, 5 * Cin, C_pad), lambda b, t: (0, 0, 0)),
            pl.BlockSpec((1, C_pad), lambda b, t: (0, 0)),
        ],
        out_specs=(
            pl.BlockSpec((None, None, th * Wo, C_pad), lambda b, t: (b, t, 0, 0)),
            pl.BlockSpec((None, None, 2, C_pad), lambda b, t: (b, t, 0, 0)),
        ),
        compiler_params=pltpu.CompilerParams(
            dimension_semantics=("parallel", "parallel"),
            vmem_limit_bytes=vmem_limit),
        cost_estimate=pl.CostEstimate(flops=flops, transcendentals=0,
                                      bytes_accessed=bytes_accessed),
    )(q0, q1, w_taps, b2d)

    # ---- tiny cross-tile reduction -> BN scale/shift (f32, plain JAX) ----
    total = jnp.sum(stats, axis=(0, 1))                     # (2, C_pad)
    y_rows = y.reshape(B, T * th, Wo, C_pad)
    pad_rows = T * th - Ho
    if pad_rows > 0:
        # Padded output rows were convolved over halo garbage; subtract their exact
        # contribution (read back from the tiny padded slice of y).
        ypad = y_rows[:, Ho:].astype(jnp.float32)
        total = total - jnp.stack([jnp.sum(ypad, axis=(0, 1, 2)),
                                   jnp.sum(ypad * ypad, axis=(0, 1, 2))], axis=0)
    M = B * Ho * Wo
    mean = total[0, :Cout] / M
    var = jnp.maximum(total[1, :Cout] / M - mean * mean, 0.0)   # biased var (training BN)
    inv_std = lax.rsqrt(var + BN_EPS)
    scale = gamma.astype(jnp.float32) * inv_std
    shift = beta.astype(jnp.float32) - mean * scale

    # ---- BN apply fused by XLA into the slice + NCHW transpose (no extra Pallas pass) ----
    y_valid = y_rows[:, :Ho, :, :Cout].astype(jnp.float32)      # (B, Ho, Wo, Cout)
    out = y_valid * scale.reshape(1, 1, 1, Cout) + shift.reshape(1, 1, 1, Cout)
    return jnp.transpose(out, (0, 3, 1, 2))


def _reference(x, weight, bias, gamma, beta):
    y = lax.conv_general_dilated(
        x, weight, window_strides=(2, 2), padding=((2, 2), (2, 2)),
        dimension_numbers=("NCHW", "OIHW", "NCHW"))
    y = y + bias.reshape(1, -1, 1, 1)
    y = jnp.maximum(y, 0.0)
    mean = jnp.mean(y, axis=(0, 2, 3), keepdims=True)
    var = jnp.mean((y - mean) ** 2, axis=(0, 2, 3), keepdims=True)
    return gamma.reshape(1, -1, 1, 1) * (y - mean) * lax.rsqrt(var + BN_EPS) \
        + beta.reshape(1, -1, 1, 1)


if __name__ == "__main__":
    B, Cin, H, W = 2, 4, 16, 16
    Cout = 8

    key = jax.random.PRNGKey(0)
    kx, kw, kb = jax.random.split(key, 3)
    x = jax.random.normal(kx, (B, Cin, H, W), dtype=jnp.float32)

    # Deterministic parameter init (shapes from nn.Conv2d / nn.BatchNorm2d __init__).
    fan_in = Cin * 5 * 5
    bound = 1.0 / (fan_in ** 0.5)
    weight = jax.random.uniform(kw, (Cout, Cin, 5, 5), jnp.float32, -bound, bound)
    bias = jax.random.uniform(kb, (Cout,), jnp.float32, -bound, bound)
    gamma = jnp.ones((Cout,), jnp.float32)   # BatchNorm2d weight init
    beta = jnp.zeros((Cout,), jnp.float32)   # BatchNorm2d bias init

    # Tight structural check: f32 end-to-end vs the XLA conv reference.
    run_f32 = jax.jit(functools.partial(
        reduction_cell, compute_dtype=jnp.float32, y_dtype=jnp.float32))
    out_f32 = jax.block_until_ready(run_f32(x, weight, bias, gamma, beta))
    ref = _reference(x, weight, bias, gamma, beta)
    assert out_f32.shape == (B, Cout, 8, 8), out_f32.shape
    assert jnp.allclose(out_f32, ref, atol=5e-4, rtol=5e-4), \
        float(jnp.max(jnp.abs(out_f32 - ref)))

    # Default fast path: bf16 MXU inputs + bf16 intermediate, f32 accumulation/stats.
    run_bf16 = jax.jit(reduction_cell)
    out_bf16 = jax.block_until_ready(run_bf16(x, weight, bias, gamma, beta))
    ref_q = _reference(x.astype(jnp.bfloat16).astype(jnp.float32),
                       weight.astype(jnp.bfloat16).astype(jnp.float32),
                       bias, gamma, beta)
    assert out_bf16.shape == (B, Cout, 8, 8), out_bf16.shape
    assert jnp.allclose(out_bf16, ref_q, atol=3e-2, rtol=3e-2), \
        float(jnp.max(jnp.abs(out_bf16 - ref_q)))

    print("KERNEL_OK")
</pallas_src>

<mosaic_0001>
module attributes {stable_mosaic.version = 11 : i64} {
  func.func @_conv_relu_stats_kernel(%arg0: i32, %arg1: i32, %arg2: memref<1x1x80x20xf32, #tpu.memory_space<vmem>>, %arg3: memref<1x1x80x20xf32, #tpu.memory_space<vmem>>, %arg4: memref<5x20x128xf32, #tpu.memory_space<vmem>>, %arg5: memref<1x128xf32, #tpu.memory_space<vmem>>, %arg6: memref<1x1x64x128xf32, #tpu.memory_space<vmem>>, %arg7: memref<1x1x2x128xf32, #tpu.memory_space<vmem>>) attributes {dimension_semantics = [#tpu.dimension_semantics<parallel>, #tpu.dimension_semantics<parallel>], iteration_bounds = array<i64: 2, 1>, scalar_prefetch = 0 : i64, scratch_operands = 0 : i64, tpu.core_type = #tpu.core_type<tc>, window_params = [{transform_indices = @transform_0, window_bounds = array<i64: 1, 1, 80, 20>}, {transform_indices = @transform_1, window_bounds = array<i64: 1, 1, 80, 20>}, {pipeline_mode = #tpu.pipeline_mode<synchronous>, transform_indices = @transform_2, window_bounds = array<i64: 5, 20, 128>}, {pipeline_mode = #tpu.pipeline_mode<synchronous>, transform_indices = @transform_3, window_bounds = array<i64: 1, 128>}, {transform_indices = @transform_4, window_bounds = array<i64: 1, 1, 64, 128>}, {transform_indices = @transform_5, window_bounds = array<i64: 1, 1, 2, 128>}]} {
    %c0 = arith.constant 0 : index
    %c0_0 = arith.constant 0 : index
    %c0_1 = arith.constant 0 : index
    %c0_2 = arith.constant 0 : index
    %0 = vector.load %arg2[%c0, %c0_0, %c0_1, %c0_2] : memref<1x1x80x20xf32, #tpu.memory_space<vmem>>, vector<1x1x64x20xf32>
    %1 = vector.shape_cast %0 : vector<1x1x64x20xf32> to vector<64x20xf32>
    %c0_3 = arith.constant 0 : index
    %c0_4 = arith.constant 0 : index
    %c0_5 = arith.constant 0 : index
    %2 = vector.load %arg4[%c0_3, %c0_4, %c0_5] : memref<5x20x128xf32, #tpu.memory_space<vmem>>, vector<1x20x128xf32>
    %3 = vector.shape_cast %2 : vector<1x20x128xf32> to vector<20x128xf32>
    %cst = arith.constant dense<0.000000e+00> : vector<64x128xf32>
    %4 = tpu.matmul %1, %3, %cst {dimension_numbers = #tpu.dot_dimension_numbers<[1], [0], [0], [1], [0, 0, 1, 1], [], []>} : vector<64x20xf32>, vector<20x128xf32>, vector<64x128xf32> -> vector<64x128xf32>
    %c0_6 = arith.constant 0 : index
    %c0_7 = arith.constant 0 : index
    %c0_8 = arith.constant 0 : index
    %c0_9 = arith.constant 0 : index
    %5 = vector.load %arg3[%c0_6, %c0_7, %c0_8, %c0_9] : memref<1x1x80x20xf32, #tpu.memory_space<vmem>>, vector<1x1x64x20xf32>
    %6 = vector.shape_cast %5 : vector<1x1x64x20xf32> to vector<64x20xf32>
    %c1 = arith.constant 1 : index
    %c0_10 = arith.constant 0 : index
    %c0_11 = arith.constant 0 : index
    %7 = vector.load %arg4[%c1, %c0_10, %c0_11] : memref<5x20x128xf32, #tpu.memory_space<vmem>>, vector<1x20x128xf32>
    %8 = vector.shape_cast %7 : vector<1x20x128xf32> to vector<20x128xf32>
    %cst_12 = arith.constant dense<0.000000e+00> : vector<64x128xf32>
    %9 = tpu.matmul %6, %8, %cst_12 {dimension_numbers = #tpu.dot_dimension_numbers<[1], [0], [0], [1], [0, 0, 1, 1], [], []>} : vector<64x20xf32>, vector<20x128xf32>, vector<64x128xf32> -> vector<64x128xf32>
    %10 = arith.addf %4, %9 : vector<64x128xf32>
    %c0_13 = arith.constant 0 : index
    %c0_14 = arith.constant 0 : index
    %c8 = arith.constant 8 : index
    %c0_15 = arith.constant 0 : index
    %11 = vector.load %arg2[%c0_13, %c0_14, %c8, %c0_15] : memref<1x1x80x20xf32, #tpu.memory_space<vmem>>, vector<1x1x64x20xf32>
    %12 = vector.shape_cast %11 : vector<1x1x64x20xf32> to vector<64x20xf32>
    %c2 = arith.constant 2 : index
    %c0_16 = arith.constant 0 : index
    %c0_17 = arith.constant 0 : index
    %13 = vector.load %arg4[%c2, %c0_16, %c0_17] : memref<5x20x128xf32, #tpu.memory_space<vmem>>, vector<1x20x128xf32>
    %14 = vector.shape_cast %13 : vector<1x20x128xf32> to vector<20x128xf32>
    %cst_18 = arith.constant dense<0.000000e+00> : vector<64x128xf32>
    %15 = tpu.matmul %12, %14, %cst_18 {dimension_numbers = #tpu.dot_dimension_numbers<[1], [0], [0], [1], [0, 0, 1, 1], [], []>} : vector<64x20xf32>, vector<20x128xf32>, vector<64x128xf32> -> vector<64x128xf32>
    %16 = arith.addf %10, %15 : vector<64x128xf32>
    %c0_19 = arith.constant 0 : index
    %c0_20 = arith.constant 0 : index
    %c8_21 = arith.constant 8 : index
    %c0_22 = arith.constant 0 : index
    %17 = vector.load %arg3[%c0_19, %c0_20, %c8_21, %c0_22] : memref<1x1x80x20xf32, #tpu.memory_space<vmem>>, vector<1x1x64x20xf32>
    %18 = vector.shape_cast %17 : vector<1x1x64x20xf32> to vector<64x20xf32>
    %c3 = arith.constant 3 : index
    %c0_23 = arith.constant 0 : index
    %c0_24 = arith.constant 0 : index
    %19 = vector.load %arg4[%c3, %c0_23, %c0_24] : memref<5x20x128xf32, #tpu.memory_space<vmem>>, vector<1x20x128xf32>
    %20 = vector.shape_cast %19 : vector<1x20x128xf32> to vector<20x128xf32>
    %cst_25 = arith.constant dense<0.000000e+00> : vector<64x128xf32>
    %21 = tpu.matmul %18, %20, %cst_25 {dimension_numbers = #tpu.dot_dimension_numbers<[1], [0], [0], [1], [0, 0, 1, 1], [], []>} : vector<64x20xf32>, vector<20x128xf32>, vector<64x128xf32> -> vector<64x128xf32>
    %22 = arith.addf %16, %21 : vector<64x128xf32>
    %c0_26 = arith.constant 0 : index
    %c0_27 = arith.constant 0 : index
    %c16 = arith.constant 16 : index
    %c0_28 = arith.constant 0 : index
    %23 = vector.load %arg2[%c0_26, %c0_27, %c16, %c0_28] : memref<1x1x80x20xf32, #tpu.memory_space<vmem>>, vector<1x1x64x20xf32>
    %24 = vector.shape_cast %23 : vector<1x1x64x20xf32> to vector<64x20xf32>
    %c4 = arith.constant 4 : index
    %c0_29 = arith.constant 0 : index
    %c0_30 = arith.constant 0 : index
    %25 = vector.load %arg4[%c4, %c0_29, %c0_30] : memref<5x20x128xf32, #tpu.memory_space<vmem>>, vector<1x20x128xf32>
    %26 = vector.shape_cast %25 : vector<1x20x128xf32> to vector<20x128xf32>
    %cst_31 = arith.constant dense<0.000000e+00> : vector<64x128xf32>
    %27 = tpu.matmul %24, %26, %cst_31 {dimension_numbers = #tpu.dot_dimension_numbers<[1], [0], [0], [1], [0, 0, 1, 1], [], []>} : vector<64x20xf32>, vector<20x128xf32>, vector<64x128xf32> -> vector<64x128xf32>
    %28 = arith.addf %22, %27 : vector<64x128xf32>
    %c0_32 = arith.constant 0 : index
    %c0_33 = arith.constant 0 : index
    %29 = vector.load %arg5[%c0_32, %c0_33] : memref<1x128xf32, #tpu.memory_space<vmem>>, vector<1x128xf32>
    %30 = vector.broadcast %29 : vector<1x128xf32> to vector<64x128xf32>
    %31 = arith.addf %28, %30 : vector<64x128xf32>
    %cst_34 = arith.constant 0.000000e+00 : f32
    %32 = vector.broadcast %cst_34 : f32 to vector<64x128xf32>
    %33 = arith.maximumf %31, %32 : vector<64x128xf32>
    %c0_35 = arith.constant 0 : index
    %c0_36 = arith.constant 0 : index
    %c0_37 = arith.constant 0 : index
    %c0_38 = arith.constant 0 : index
    %34 = vector.load %arg6[%c0_35, %c0_36, %c0_37, %c0_38] : memref<1x1x64x128xf32, #tpu.memory_space<vmem>>, vector<1x1x64x128xf32>
    %35 = vector.shape_cast %34 : vector<1x1x64x128xf32> to vector<64x128xf32>
    %36 = vector.shape_cast %33 : vector<64x128xf32> to vector<1x1x64x128xf32>
    tpu.vector_store %arg6[%c0_35, %c0_36, %c0_37, %c0_38], %36 {strides = array<i32>} : memref<1x1x64x128xf32, #tpu.memory_space<vmem>>, vector<1x1x64x128xf32>,
    %cst_39 = arith.constant dense<0.000000e+00> : vector<128xf32>
    %37 = vector.multi_reduction <add>, %33, %cst_39 [0] : vector<64x128xf32> to vector<128xf32>
    %38 = vector.shape_cast %37 : vector<128xf32> to vector<1x128xf32>
    %c0_40 = arith.constant 0 : index
    %c0_41 = arith.constant 0 : index
    %c0_42 = arith.constant 0 : index
    %c0_43 = arith.constant 0 : index
    %39 = vector.load %arg7[%c0_40, %c0_41, %c0_42, %c0_43] : memref<1x1x2x128xf32, #tpu.memory_space<vmem>>, vector<1x1x1x128xf32>
    %40 = vector.shape_cast %39 : vector<1x1x1x128xf32> to vector<1x128xf32>
    %41 = vector.shape_cast %38 : vector<1x128xf32> to vector<1x1x1x128xf32>
    tpu.vector_store %arg7[%c0_40, %c0_41, %c0_42, %c0_43], %41 {strides = array<i32>} : memref<1x1x2x128xf32, #tpu.memory_space<vmem>>, vector<1x1x1x128xf32>,
    %42 = arith.mulf %33, %33 : vector<64x128xf32>
    %cst_44 = arith.constant dense<0.000000e+00> : vector<128xf32>
    %43 = vector.multi_reduction <add>, %42, %cst_44 [0] : vector<64x128xf32> to vector<128xf32>
    %44 = vector.shape_cast %43 : vector<128xf32> to vector<1x128xf32>
    %c0_45 = arith.constant 0 : index
    %c0_46 = arith.constant 0 : index
    %c1_47 = arith.constant 1 : index
    %c0_48 = arith.constant 0 : index
    %45 = vector.load %arg7[%c0_45, %c0_46, %c1_47, %c0_48] : memref<1x1x2x128xf32, #tpu.memory_space<vmem>>, vector<1x1x1x128xf32>
    %46 = vector.shape_cast %45 : vector<1x1x1x128xf32> to vector<1x128xf32>
    %47 = vector.shape_cast %44 : vector<1x128xf32> to vector<1x1x1x128xf32>
    tpu.vector_store %arg7[%c0_45, %c0_46, %c1_47, %c0_48], %47 {strides = array<i32>} : memref<1x1x2x128xf32, #tpu.memory_space<vmem>>, vector<1x1x1x128xf32>,
    return
  }
  func.func @transform_0(%arg0: i32, %arg1: i32) -> (i32, i32, i32, i32) {
    %c0_i32 = arith.constant 0 : i32
    %c0_i32_0 = arith.constant 0 : i32
    %c0_i32_1 = arith.constant 0 : i32
    return %arg0, %arg1, %c0_i32, %c0_i32_0 : i32, i32, i32, i32
  }
  func.func @transform_1(%arg0: i32, %arg1: i32) -> (i32, i32, i32, i32) {
    %c0_i32 = arith.constant 0 : i32
    %c0_i32_0 = arith.constant 0 : i32
    %c0_i32_1 = arith.constant 0 : i32
    return %arg0, %arg1, %c0_i32, %c0_i32_0 : i32, i32, i32, i32
  }
  func.func @transform_2(%arg0: i32, %arg1: i32) -> (i32, i32, i32) {
    %c0_i32 = arith.constant 0 : i32
    %c0_i32_0 = arith.constant 0 : i32
    %c0_i32_1 = arith.constant 0 : i32
    %c0_i32_2 = arith.constant 0 : i32
    return %c0_i32, %c0_i32_0, %c0_i32_1 : i32, i32, i32
  }
  func.func @transform_3(%arg0: i32, %arg1: i32) -> (i32, i32) {
    %c0_i32 = arith.constant 0 : i32
    %c0_i32_0 = arith.constant 0 : i32
    %c0_i32_1 = arith.constant 0 : i32
    return %c0_i32, %c0_i32_0 : i32, i32
  }
  func.func @transform_4(%arg0: i32, %arg1: i32) -> (i32, i32, i32, i32) {
    %c0_i32 = arith.constant 0 : i32
    %c0_i32_0 = arith.constant 0 : i32
    %c0_i32_1 = arith.constant 0 : i32
    return %arg0, %arg1, %c0_i32, %c0_i32_0 : i32, i32, i32, i32
  }
  func.func @transform_5(%arg0: i32, %arg1: i32) -> (i32, i32, i32, i32) {
    %c0_i32 = arith.constant 0 : i32
    %c0_i32_0 = arith.constant 0 : i32
    %c0_i32_1 = arith.constant 0 : i32
    return %arg0, %arg1, %c0_i32, %c0_i32_0 : i32, i32, i32, i32
  }
}

</mosaic_0001>

<llo_original>
// kernel: reduction_cell.1
$region0: #{reduction_cell.1}
  #allocation0 [shape = 'u32[]', space=smem, size = 0x4, offset = 0x4, fixed_abs, tag = 'smem constant byte address 0x4 - core index']
  #allocation1 [shape = 'u32[144,128]{1,0:T(1,128)}', space=vmem, size = 0x12000, scoped, tag = 'internal scratch']
  %s0 = inlined_call_operand.vmem [shape: f32[2,1,80,20], index: 0, kind: input, shape index: {}]
  %s1 = inlined_call_operand.vmem [shape: f32[2,1,80,20], index: 1, kind: input, shape index: {}]
  %s2 = inlined_call_operand.vmem [shape: f32[5,20,128], index: 2, kind: input, shape index: {}]
  %s3 = inlined_call_operand.vmem [shape: f32[1,128], index: 3, kind: input, shape index: {}]
  %s4 = inlined_call_operand.vmem [shape: f32[2,1,64,128], index: 4, kind: output, shape index: {0}]
  %s5 = inlined_call_operand.vmem [shape: f32[2,1,2,128], index: 5, kind: output, shape index: {1}]
  %6 = xla_tuple %s4, %s5
  %s7 = sld [smem:[#allocation0]]
  $region57: #{reduction_cell.1} parent=0
    _
  %s9 = ssub.s32 1, %s7
  %s10 = scalar_select 0, %s9, %s7
  loop: start=0, step=1, limit=4
  $region2: #{reduction_cell.1} parent=0 // loop_pre_header
    _
  $region3: #{reduction_cell.1} parent=0 // loop_header
    %s12 = sphi 0, %s16
    %p13 = scmp.ge.s32.totalorder %s12, 4
    %s19 = sphi 0, %s31
    %s20 = sphi 0, %s27
    %s21 = sphi 0, %s19
    %s22 = sphi 0, %s20
    %s23 = sphi 0, %s21
    %s24 = sphi 0, %s22
    %s36 = sphi 0, %s38
    %s39 = sphi 0, %s36
    %s40 = sphi 0, %s39
    %s56 = sphi 0, %s40
    %s64 = sphi 0, %s66
    %s67 = sphi 0, %s64
    %s68 = sphi 0, %s67
    %s84 = sphi 0, %s68
    %s88 = sphi 0, %s88
    %s90 = sphi 0, %s88
    %s91 = sphi 0, %s90
    %s105 = sphi 0, %s91
    %s109 = sphi 0, %s109
    %s111 = sphi 0, %s109
    %s112 = sphi 0, %s111
    %s126 = sphi 0, %s112
    %s134 = sphi 0, %s136
    %s137 = sphi 0, %s134
    %s138 = sphi 0, %s137
    %s154 = sphi 0, %s138
    %s162 = sphi 0, %s164
    %s165 = sphi 0, %s162
    %s166 = sphi 0, %s165
    %s182 = sphi 0, %s166
  $region4: #{reduction_cell.1} parent=0 // loop_header_branch
    %15 = sbr.rel (%p13) target = $region8
  $region5: #{reduction_cell.1} parent=0 // loop_body
    %s17 = ssub.s32 %s12, 1
    %s18 = ssub.s32 %s12, 2
    %s25 = sadd.s32 1, %s20
    %p26 = scmp.ge.s32.totalorder %s25, 1
    %s27 = scalar_select %p26, 0, %s25
    %s28 = sadd.s32 1, %s19
    %s29 = scalar_select %p26, %s28, %s19
    %p30 = scmp.ge.s32.totalorder %s29, 2
    %s31 = scalar_select %p30, 0, %s29
    %s32 = ssub.s32 %s19, %s31
    %s33 = ssub.s32 %s20, %s27
    %s34 = sor.u32 %s32, %s33
    %p35 = scmp.eq.s32.totalorder %s34, 0
    %s37 = sadd.s32 %s36, 1
    %s38 = scalar_select %p35, %s36, %s37
    %p41 = pneg %p35
    %p42 = scmp.eq.s32.totalorder %s12, 1
    %p43 = por %p41, %p42
    %p44 = scmp.ne.s32.totalorder %s36, %s39
    %p45 = scmp.eq.s32.totalorder %s12, 0
    %p46 = por %p44, %p45
    %p47 = scmp.ne.s32.totalorder %s36, %s39
    %p48 = scmp.eq.s32.totalorder %s17, 1
    %p49 = por %p47, %p48
    %p50 = scmp.ne.s32.totalorder %s39, %s40
    %p51 = scmp.eq.s32.totalorder %s17, 0
    %p52 = por %p50, %p51
    %p53 = scmp.ne.s32.totalorder %s39, %s40
    %p54 = scmp.eq.s32.totalorder %s18, 1
    %p55 = por %p53, %p54
    %p57 = scmp.ne.s32.totalorder %s40, %s56
    %p58 = scmp.eq.s32.totalorder %s18, 0
    %p59 = por %p57, %p58
    %s60 = ssub.s32 %s19, %s31
    %s61 = ssub.s32 %s20, %s27
    %s62 = sor.u32 %s60, %s61
    %p63 = scmp.eq.s32.totalorder %s62, 0
    %s65 = sadd.s32 %s64, 1
    %s66 = scalar_select %p63, %s64, %s65
    %p69 = pneg %p63
    %p70 = scmp.eq.s32.totalorder %s12, 1
    %p71 = por %p69, %p70
    %p72 = scmp.ne.s32.totalorder %s64, %s67
    %p73 = scmp.eq.s32.totalorder %s12, 0
    %p74 = por %p72, %p73
    %p75 = scmp.ne.s32.totalorder %s64, %s67
    %p76 = scmp.eq.s32.totalorder %s17, 1
    %p77 = por %p75, %p76
    %p78 = scmp.ne.s32.totalorder %s67, %s68
    %p79 = scmp.eq.s32.totalorder %s17, 0
    %p80 = por %p78, %p79
    %p81 = scmp.ne.s32.totalorder %s67, %s68
    %p82 = scmp.eq.s32.totalorder %s18, 1
    %p83 = por %p81, %p82
    %p85 = scmp.ne.s32.totalorder %s68, %s84
    %p86 = scmp.eq.s32.totalorder %s18, 0
    %p87 = por %p85, %p86
    %s89 = sadd.s32 %s88, 1
    %p92 = scmp.eq.s32.totalorder %s12, 1
    %p93 = scmp.ne.s32.totalorder %s88, %s90
    %p94 = scmp.eq.s32.totalorder %s12, 0
    %p95 = por %p93, %p94
    %p96 = scmp.ne.s32.totalorder %s88, %s90
    %p97 = scmp.eq.s32.totalorder %s17, 1
    %p98 = por %p96, %p97
    %p99 = scmp.ne.s32.totalorder %s90, %s91
    %p100 = scmp.eq.s32.totalorder %s17, 0
    %p101 = por %p99, %p100
    %p102 = scmp.ne.s32.totalorder %s90, %s91
    %p103 = scmp.eq.s32.totalorder %s18, 1
    %p104 = por %p102, %p103
    %p106 = scmp.ne.s32.totalorder %s91, %s105
    %p107 = scmp.eq.s32.totalorder %s18, 0
    %p108 = por %p106, %p107
    %s110 = sadd.s32 %s109, 1
    %p113 = scmp.eq.s32.totalorder %s12, 1
    %p114 = scmp.ne.s32.totalorder %s109, %s111
    %p115 = scmp.eq.s32.totalorder %s12, 0
    %p116 = por %p114, %p115
    %p117 = scmp.ne.s32.totalorder %s109, %s111
    %p118 = scmp.eq.s32.totalorder %s17, 1
    %p119 = por %p117, %p118
    %p120 = scmp.ne.s32.totalorder %s111, %s112
    %p121 = scmp.eq.s32.totalorder %s17, 0
    %p122 = por %p120, %p121
    %p123 = scmp.ne.s32.totalorder %s111, %s112
    %p124 = scmp.eq.s32.totalorder %s18, 1
    %p125 = por %p123, %p124
    %p127 = scmp.ne.s32.totalorder %s112, %s126
    %p128 = scmp.eq.s32.totalorder %s18, 0
    %p129 = por %p127, %p128
    %s130 = ssub.s32 %s19, %s31
    %s131 = ssub.s32 %s20, %s27
    %s132 = sor.u32 %s130, %s131
    %p133 = scmp.eq.s32.totalorder %s132, 0
    %s135 = sadd.s32 %s134, 1
    %s136 = scalar_select %p133, %s134, %s135
    %p139 = pneg %p133
    %p140 = scmp.eq.s32.totalorder %s12, 1
    %p141 = por %p139, %p140
    %p142 = scmp.ne.s32.totalorder %s134, %s137
    %p143 = scmp.eq.s32.totalorder %s12, 0
    %p144 = por %p142, %p143
    %p145 = scmp.ne.s32.totalorder %s134, %s137
    %p146 = scmp.eq.s32.totalorder %s17, 1
    %p147 = por %p145, %p146
    %p148 = scmp.ne.s32.totalorder %s137, %s138
    %p149 = scmp.eq.s32.totalorder %s17, 0
    %p150 = por %p148, %p149
    %p151 = scmp.ne.s32.totalorder %s137, %s138
    %p152 = scmp.eq.s32.totalorder %s18, 1
    %p153 = por %p151, %p152
    %p155 = scmp.ne.s32.totalorder %s138, %s154
    %p156 = scmp.eq.s32.totalorder %s18, 0
    %p157 = por %p155, %p156
    %s158 = ssub.s32 %s19, %s31
    %s159 = ssub.s32 %s20, %s27
    %s160 = sor.u32 %s158, %s159
    %p161 = scmp.eq.s32.totalorder %s160, 0
    %s163 = sadd.s32 %s162, 1
    %s164 = scalar_select %p161, %s162, %s163
    %p167 = pneg %p161
    %p168 = scmp.eq.s32.totalorder %s12, 1
    %p169 = por %p167, %p168
    %p170 = scmp.ne.s32.totalorder %s162, %s165
    %p171 = scmp.eq.s32.totalorder %s12, 0
    %p172 = por %p170, %p171
    %p173 = scmp.ne.s32.totalorder %s162, %s165
    %p174 = scmp.eq.s32.totalorder %s17, 1
    %p175 = por %p173, %p174
    %p176 = scmp.ne.s32.totalorder %s165, %s166
    %p177 = scmp.eq.s32.totalorder %s17, 0
    %p178 = por %p176, %p177
    %p179 = scmp.ne.s32.totalorder %s165, %s166
    %p180 = scmp.eq.s32.totalorder %s18, 1
    %p181 = por %p179, %p180
    %p183 = scmp.ne.s32.totalorder %s166, %s182
    %p184 = scmp.eq.s32.totalorder %s18, 0
    %p185 = por %p183, %p184
    %p186 = scmp.le.s32.totalorder 1, %s12
    %p187 = scmp.lt.s32.totalorder %s12, 3
    %p188 = pnand %p186, %p187
    %p189 = pneg %p188
    // Predicated region
    $region9: #{reduction_cell.1} parent=5 // pred_check
      _
    $region10: #{reduction_cell.1} parent=5 // pred_check_branch
      %191 = sbr.rel (%p188) target = $region12
    $region11: #{reduction_cell.1} parent=5 // pred_region
      %s192 = ssub.s32 %s12, 1
      // Predicated region
      $region13: #{reduction_cell.1} parent=11 // pred_check
        %p193 = pneg %p101
      $region14: #{reduction_cell.1} parent=11 // pred_check_branch
        %195 = sbr.rel (%p193) target = $region16
      $region15: #{reduction_cell.1} parent=11 // pred_region
        _
      $region16: #{reduction_cell.1} parent=11 // pred_fallthru
        _
      // Predicated region
      $region17: #{reduction_cell.1} parent=11 // pred_check
        %p196 = pneg %p122
      $region18: #{reduction_cell.1} parent=11 // pred_check_branch
        %198 = sbr.rel (%p196) target = $region20
      $region19: #{reduction_cell.1} parent=11 // pred_region
        _
      $region20: #{reduction_cell.1} parent=11 // pred_fallthru
        _
    $region12: #{reduction_cell.1} parent=5 // pred_fallthru
      _
    %p199 = scmp.lt.s32.totalorder %s12, 2
    // Predicated region
    $region21: #{reduction_cell.1} parent=5 // pred_check
      %p200 = pneg %p199
    $region22: #{reduction_cell.1} parent=5 // pred_check_branch
      %202 = sbr.rel (%p200) target = $region24
    $region23: #{reduction_cell.1} parent=5 // pred_region
      // Predicated region
      $region25: #{reduction_cell.1} parent=23 // pred_check
        %p203 = pneg %p46
      $region26: #{reduction_cell.1} parent=23 // pred_check_branch
        %205 = sbr.rel (%p203) target = $region28
      $region27: #{reduction_cell.1} parent=23 // pred_region
        %p206 = scmp.lt.s32.totalorder %s19, 1
        %s207 = scalar_select %p206, %s19, 1
        %p208 = scmp.lt.s32.totalorder %s20, 0
        %s209 = scalar_select %p208, %s20, 0
        %s210 = smul.addr %s209, 10
        %s211 = smul.addr %s207, 10
        %s212 = sadd.s32 %s210, %s211
        %s213 = smul.addr %s212, 8
        %s214 = scalar_lea.vmem %s0, %s213
      $region28: #{reduction_cell.1} parent=23 // pred_fallthru
        _
      // Predicated region
      $region29: #{reduction_cell.1} parent=23 // pred_check
        %p215 = pneg %p74
      $region30: #{reduction_cell.1} parent=23 // pred_check_branch
        %217 = sbr.rel (%p215) target = $region32
      $region31: #{reduction_cell.1} parent=23 // pred_region
        %p218 = scmp.lt.s32.totalorder %s19, 1
        %s219 = scalar_select %p218, %s19, 1
        %p220 = scmp.lt.s32.totalorder %s20, 0
        %s221 = scalar_select %p220, %s20, 0
        %s222 = smul.addr %s221, 10
        %s223 = smul.addr %s219, 10
        %s224 = sadd.s32 %s222, %s223
        %s225 = smul.addr %s224, 8
        %s226 = scalar_lea.vmem %s1, %s225
      $region32: #{reduction_cell.1} parent=23 // pred_fallthru
        _
    $region24: #{reduction_cell.1} parent=5 // pred_fallthru
      _
    %p227 = scmp.le.s32.totalorder 1, %s12
    %p228 = scmp.lt.s32.totalorder %s12, 3
    %p229 = pnand %p227, %p228
    %p230 = pneg %p229
    // Predicated region
    $region33: #{reduction_cell.1} parent=5 // pred_check
      _
    $region34: #{reduction_cell.1} parent=5 // pred_check_branch
      %232 = sbr.rel (%p229) target = $region36
    $region35: #{reduction_cell.1} parent=5 // pred_region
      %s233 = ssub.s32 %s12, 1
      %p234 = scmp.lt.s32.totalorder %s21, 1
      %s235 = scalar_select %p234, %s21, 1
      %p236 = scmp.lt.s32.totalorder %s22, 0
      %s237 = scalar_select %p236, %s22, 0
      %s238 = smul.addr %s237, 10
      %s239 = smul.addr %s235, 10
      %s240 = sadd.s32 %s238, %s239
      %s241 = smul.addr %s240, 8
      %s242 = scalar_lea.vmem %s0, %s241
      %p243 = pneg %p52
      %p244 = pneg %p49
      %p245 = scmp.lt.s32.totalorder %s21, 1
      %s246 = scalar_select %p245, %s21, 1
      %p247 = scmp.lt.s32.totalorder %s22, 0
      %s248 = scalar_select %p247, %s22, 0
      %s249 = smul.addr %s248, 10
      %s250 = smul.addr %s246, 10
      %s251 = sadd.s32 %s249, %s250
      %s252 = smul.addr %s251, 8
      %s253 = scalar_lea.vmem %s1, %s252
      %p254 = pneg %p80
      %p255 = pneg %p77
      %p256 = pneg %p101
      %p257 = pneg %p98
      %p258 = pneg %p122
      %p259 = pneg %p119
      %p260 = pneg %p150
      %p261 = pneg %p147
      %p262 = scmp.lt.s32.totalorder %s21, 1
      %s263 = scalar_select %p262, %s21, 1
      %p264 = scmp.lt.s32.totalorder %s22, 0
      %s265 = scalar_select %p264, %s22, 0
      %s266 = smul.addr %s265, 8
      %s267 = smul.addr %s263, 8
      %s268 = sadd.s32 %s266, %s267
      %s269 = smul.addr %s268, 8
      %s270 = scalar_lea.vmem %s4, %s269
      %p271 = pneg %p178
      %p272 = pneg %p175
      %p273 = scmp.lt.s32.totalorder %s21, 1
      %s274 = scalar_select %p273, %s21, 1
      %p275 = scmp.lt.s32.totalorder %s22, 0
      %s276 = scalar_select %p275, %s22, 0
      %s277 = sadd.s32 %s276, %s274
      %s278 = smul.addr %s277, 2
      %s279 = scalar_lea.vmem %s5, %s278
      %p280 = scmp.lt.s32.totalorder %s21, 1
      %s281 = scalar_select %p280, %s21, 1
      %p282 = scmp.lt.s32.totalorder %s22, 0
      %s283 = scalar_select %p282, %s22, 0
      %s284 = smul.addr %s283, 10
      %s285 = smul.addr %s281, 10
      %s286 = sadd.s32 %s284, %s285
      %s287 = smul.addr %s286, 8
      %s288 = scalar_lea.vmem %s0, %s287
      %p289 = scmp.lt.s32.totalorder %s21, 1
      %s290 = scalar_select %p289, %s21, 1
      %p291 = scmp.lt.s32.totalorder %s22, 0
      %s292 = scalar_select %p291, %s22, 0
      %s293 = smul.addr %s292, 10
      %s294 = smul.addr %s290, 10
      %s295 = sadd.s32 %s293, %s294
      %s296 = smul.addr %s295, 8
      %s297 = scalar_lea.vmem %s1, %s296
      %p298 = scmp.lt.s32.totalorder %s21, 1
      %s299 = scalar_select %p298, %s21, 1
      %p300 = scmp.lt.s32.totalorder %s22, 0
      %s301 = scalar_select %p300, %s22, 0
      %s302 = smul.addr %s301, 8
      %s303 = smul.addr %s299, 8
      %s304 = sadd.s32 %s302, %s303
      %s305 = smul.addr %s304, 8
      %s306 = scalar_lea.vmem %s4, %s305
      %p307 = scmp.lt.s32.totalorder %s21, 1
      %s308 = scalar_select %p307, %s21, 1
      %p309 = scmp.lt.s32.totalorder %s22, 0
      %s310 = scalar_select %p309, %s22, 0
      %s311 = sadd.s32 %s310, %s308
      %s312 = smul.addr %s311, 2
      %s313 = scalar_lea.vmem %s5, %s312
      %v314 = vld [vmem:[%s288] sm:$0xff]
      %v315 = vld [vmem:[%s288 + $0x8] sm:$0xff]
      %v316 = vld [vmem:[%s288 + $0x10] sm:$0xff]
      %v317 = vld [vmem:[%s288 + $0x18] sm:$0xff]
      %v318 = vld [vmem:[%s288 + $0x20] sm:$0xff]
      %v319 = vld [vmem:[%s288 + $0x28] sm:$0xff]
      %v320 = vld [vmem:[%s288 + $0x30] sm:$0xff]
      %v321 = vld [vmem:[%s288 + $0x38] sm:$0xff]
      %v322 = vld [vmem:[%s2] sm:$0xff]
      %v323 = vld [vmem:[%s2 + $0x8] sm:$0xff]
      %v324 = vld [vmem:[%s2 + $0x10] sm:$0xf]
      %v325 = vld [vmem:[%s297] sm:$0xff]
      %v326 = vld [vmem:[%s297 + $0x8] sm:$0xff]
      %v327 = vld [vmem:[%s297 + $0x10] sm:$0xff]
      %v328 = vld [vmem:[%s297 + $0x18] sm:$0xff]
      %v329 = vld [vmem:[%s297 + $0x20] sm:$0xff]
      %v330 = vld [vmem:[%s297 + $0x28] sm:$0xff]
      %v331 = vld [vmem:[%s297 + $0x30] sm:$0xff]
      %v332 = vld [vmem:[%s297 + $0x38] sm:$0xff]
      %s333 = scalar_lea.vmem %s2, 24
      %v334 = vld [vmem:[%s333] sm:$0xff]
      %v335 = vld [vmem:[%s333 + $0x8] sm:$0xff]
      %v336 = vld [vmem:[%s333 + $0x10] sm:$0xf]
      %vm337 = vcmask 162816
      %v339 = vsel %vm337, %v325, 0
      %v342 = vsel %vm337, %v326, 0
      %v345 = vsel %vm337, %v327, 0
      %v348 = vsel %vm337, %v328, 0
      %v351 = vsel %vm337, %v329, 0
      %v354 = vsel %vm337, %v330, 0
      %v357 = vsel %vm337, %v331, 0
      %v360 = vsel %vm337, %v332, 0
      %vm362 = vcmask 1043456
      %v364 = vsel %vm362, %v336, 0
      %366 = vmatprep.subr.mxu0 0.0
      %367 = vmatpush1.msra.mxu0 0.0
      %368 = vmatprep.subr.mxu0 0.0
      %369 = vmatpush1.msra.mxu0 0.0
      %370 = vmatprep.subr.mxu0 0.0
      %371 = vmatpush1.msra.mxu0 0.0
      %372 = vmatprep.subr.mxu0 0.0
      %373 = vmatpush1.msra.mxu0 0.0
      %374 = vmatprep.subr.mxu0 0.0
      %375 = vmatpush1.msra.mxu0 0.0
      %376 = vmatprep.subr.mxu0 0.0
      %377 = vmatpush1.msra.mxu0 0.0
      %378 = vmatprep.subr.mxu0 0.0
      %379 = vmatpush1.msra.mxu0 0.0
      %380 = vmatprep.subr.mxu0 0.0
      %381 = vmatpush1.msra.mxu0 0.0
      %382 = vmatprep.subr.mxu0 0.0
      %383 = vmatpush1.msra.mxu0 0.0
      %384 = vmatprep.subr.mxu0 0.0
      %385 = vmatpush1.msra.mxu0 0.0
      %386 = vmatprep.subr.mxu0 0.0
      %387 = vmatpush1.msra.mxu0 0.0
      %388 = vmatprep.subr.mxu0 0.0
      %389 = vmatpush1.msra.mxu0 0.0
      %390 = vmatprep.subr.mxu0 0.0
      %391 = vmatpush1.msra.mxu0 0.0
      %392 = vmatprep.subr.mxu0 0.0
      %393 = vmatpush1.msra.mxu0 %v364
      %394 = vmatprep.subr.mxu0 0.0
      %395 = vmatpush1.msra.mxu0 %v335
      %396 = vmatprep.subr.mxu0 0.0
      %397 = vmatpush1.msra.mxu0 %v334
      %398 = vmatprep.subr.mxu0 0.0
      %399 = vmatpush2.msra.mxu0 0.0
      %400 = vmatprep.subr.mxu0 0.0
      %401 = vmatpush2.msra.mxu0 0.0
      %402 = vmatprep.subr.mxu0 0.0
      %403 = vmatpush2.msra.mxu0 0.0
      %404 = vmatprep.subr.mxu0 0.0
      %405 = vmatpush2.msra.mxu0 0.0
      %406 = vmatprep.subr.mxu0 0.0
      %407 = vmatpush2.msra.mxu0 0.0
      %408 = vmatprep.subr.mxu0 0.0
      %409 = vmatpush2.msra.mxu0 0.0
      %410 = vmatprep.subr.mxu0 0.0
      %411 = vmatpush2.msra.mxu0 0.0
      %412 = vmatprep.subr.mxu0 0.0
      %413 = vmatpush2.msra.mxu0 0.0
      %414 = vmatprep.subr.mxu0 0.0
      %415 = vmatpush2.msra.mxu0 0.0
      %416 = vmatprep.subr.mxu0 0.0
      %417 = vmatpush2.msra.mxu0 0.0
      %418 = vmatprep.subr.mxu0 0.0
      %419 = vmatpush2.msra.mxu0 0.0
      %420 = vmatprep.subr.mxu0 0.0
      %421 = vmatpush2.msra.mxu0 0.0
      %422 = vmatprep.subr.mxu0 0.0
      %423 = vmatpush2.msra.mxu0 0.0
      %424 = vmatprep.subr.mxu0 0.0
      %425 = vmatpush2.msra.mxu0 0.0
      %426 = vmatprep.subr.mxu0 0.0
      %427 = vmatpush2.msra.mxu0 0.0
      %428 = vmatprep.subr.mxu0 0.0
      %429 = vmatpush2.msra.mxu0 0.0
      %430 = vmatprep.mubr.f32.mxu0 0.0
      %431 = vmatmul.mubr.f32.gmra.mxu0 %v339
      %v432 = vpop.f32.mrf.mxu0
      %v433 = vadd.f32 0.0, %v432
      %v434 = vpop.f32.mrf.mxu0
      %435 = vmatprep.mubr.f32.mxu0 0.0
      %436 = vmatmul.mubr.f32.gmra.mxu0 %v342
      %v437 = vpop.f32.mrf.mxu0
      %v438 = vadd.f32 0.0, %v437
      %v439 = vpop.f32.mrf.mxu0
      %440 = vmatprep.mubr.f32.mxu0 0.0
      %441 = vmatmul.mubr.f32.gmra.mxu0 %v345
      %v442 = vpop.f32.mrf.mxu0
      %v443 = vadd.f32 0.0, %v442
      %v444 = vpop.f32.mrf.mxu0
      %445 = vmatprep.mubr.f32.mxu0 0.0
      %446 = vmatmul.mubr.f32.gmra.mxu0 %v348
      %v447 = vpop.f32.mrf.mxu0
      %v448 = vadd.f32 0.0, %v447
      %v449 = vpop.f32.mrf.mxu0
      %450 = vmatprep.mubr.f32.mxu0 0.0
      %451 = vmatmul.mubr.f32.gmra.mxu0 %v351
      %v452 = vpop.f32.mrf.mxu0
      %v453 = vadd.f32 0.0, %v452
      %v454 = vpop.f32.mrf.mxu0
      %455 = vmatprep.mubr.f32.mxu0 0.0
      %456 = vmatmul.mubr.f32.gmra.mxu0 %v354
      %v457 = vpop.f32.mrf.mxu0
      %v458 = vadd.f32 0.0, %v457
      %v459 = vpop.f32.mrf.mxu0
      %460 = vmatprep.mubr.f32.mxu0 0.0
      %461 = vmatmul.mubr.f32.gmra.mxu0 %v357
      %v462 = vpop.f32.mrf.mxu0
      %v463 = vadd.f32 0.0, %v462
      %v464 = vpop.f32.mrf.mxu0
      %465 = vmatprep.mubr.f32.mxu0 0.0
      %466 = vmatmul.mubr.f32.gmra.mxu0 %v360
      %v467 = vpop.f32.mrf.mxu0
      %v468 = vadd.f32 0.0, %v467
      %v469 = vpop.f32.mrf.mxu0
      %470 = vdwg.mxu0
      %v472 = vsel %vm337, %v314, 0
      %v475 = vsel %vm337, %v315, 0
      %v478 = vsel %vm337, %v316, 0
      %v481 = vsel %vm337, %v317, 0
      %v484 = vsel %vm337, %v318, 0
      %v487 = vsel %vm337, %v319, 0
      %v490 = vsel %vm337, %v320, 0
      %v493 = vsel %vm337, %v321, 0
      %v496 = vsel %vm362, %v324, 0
      %498 = vmatprep.subr.mxu0 0.0
      %499 = vmatpush1.msra.mxu0 0.0
      %500 = vmatprep.subr.mxu0 0.0
      %501 = vmatpush1.msra.mxu0 0.0
      %502 = vmatprep.subr.mxu0 0.0
      %503 = vmatpush1.msra.mxu0 0.0
      %504 = vmatprep.subr.mxu0 0.0
      %505 = vmatpush1.msra.mxu0 0.0
      %506 = vmatprep.subr.mxu0 0.0
      %507 = vmatpush1.msra.mxu0 0.0
      %508 = vmatprep.subr.mxu0 0.0
      %509 = vmatpush1.msra.mxu0 0.0
      %510 = vmatprep.subr.mxu0 0.0
      %511 = vmatpush1.msra.mxu0 0.0
      %512 = vmatprep.subr.mxu0 0.0
      %513 = vmatpush1.msra.mxu0 0.0
      %514 = vmatprep.subr.mxu0 0.0
      %515 = vmatpush1.msra.mxu0 0.0
      %516 = vmatprep.subr.mxu0 0.0
      %517 = vmatpush1.msra.mxu0 0.0
      %518 = vmatprep.subr.mxu0 0.0
      %519 = vmatpush1.msra.mxu0 0.0
      %520 = vmatprep.subr.mxu0 0.0
      %521 = vmatpush1.msra.mxu0 0.0
      %522 = vmatprep.subr.mxu0 0.0
      %523 = vmatpush1.msra.mxu0 0.0
      %524 = vmatprep.subr.mxu0 0.0
      %525 = vmatpush1.msra.mxu0 %v496
      %526 = vmatprep.subr.mxu0 0.0
      %527 = vmatpush1.msra.mxu0 %v323
      %528 = vmatprep.subr.mxu0 0.0
      %529 = vmatpush1.msra.mxu0 %v322
      %530 = vmatprep.subr.mxu0 0.0
      %531 = vmatpush2.msra.mxu0 0.0
      %532 = vmatprep.subr.mxu0 0.0
      %533 = vmatpush2.msra.mxu0 0.0
      %534 = vmatprep.subr.mxu0 0.0
      %535 = vmatpush2.msra.mxu0 0.0
      %536 = vmatprep.subr.mxu0 0.0
      %537 = vmatpush2.msra.mxu0 0.0
      %538 = vmatprep.subr.mxu0 0.0
      %539 = vmatpush2.msra.mxu0 0.0
      %540 = vmatprep.subr.mxu0 0.0
      %541 = vmatpush2.msra.mxu0 0.0
      %542 = vmatprep.subr.mxu0 0.0
      %543 = vmatpush2.msra.mxu0 0.0
      %544 = vmatprep.subr.mxu0 0.0
      %545 = vmatpush2.msra.mxu0 0.0
      %546 = vmatprep.subr.mxu0 0.0
      %547 = vmatpush2.msra.mxu0 0.0
      %548 = vmatprep.subr.mxu0 0.0
      %549 = vmatpush2.msra.mxu0 0.0
      %550 = vmatprep.subr.mxu0 0.0
      %551 = vmatpush2.msra.mxu0 0.0
      %552 = vmatprep.subr.mxu0 0.0
      %553 = vmatpush2.msra.mxu0 0.0
      %554 = vmatprep.subr.mxu0 0.0
      %555 = vmatpush2.msra.mxu0 0.0
      %556 = vmatprep.subr.mxu0 0.0
      %557 = vmatpush2.msra.mxu0 0.0
      %558 = vmatprep.subr.mxu0 0.0
      %559 = vmatpush2.msra.mxu0 0.0
      %560 = vmatprep.subr.mxu0 0.0
      %561 = vmatpush2.msra.mxu0 0.0
      %562 = vmatprep.mubr.f32.mxu0 0.0
      %563 = vmatmul.mubr.f32.gmra.mxu0 %v472
      %v564 = vpop.f32.mrf.mxu0
      %v565 = vadd.f32 %v433, %v564
      %v566 = vpop.f32.mrf.mxu0
      %567 = vmatprep.mubr.f32.mxu0 0.0
      %568 = vmatmul.mubr.f32.gmra.mxu0 %v475
      %v569 = vpop.f32.mrf.mxu0
      %v570 = vadd.f32 %v438, %v569
      %v571 = vpop.f32.mrf.mxu0
      %572 = vmatprep.mubr.f32.mxu0 0.0
      %573 = vmatmul.mubr.f32.gmra.mxu0 %v478
      %v574 = vpop.f32.mrf.mxu0
      %v575 = vadd.f32 %v443, %v574
      %v576 = vpop.f32.mrf.mxu0
      %577 = vmatprep.mubr.f32.mxu0 0.0
      %578 = vmatmul.mubr.f32.gmra.mxu0 %v481
      %v579 = vpop.f32.mrf.mxu0
      %v580 = vadd.f32 %v448, %v579
      %v581 = vpop.f32.mrf.mxu0
      %582 = vmatprep.mubr.f32.mxu0 0.0
      %583 = vmatmul.mubr.f32.gmra.mxu0 %v484
      %v584 = vpop.f32.mrf.mxu0
      %v585 = vadd.f32 %v453, %v584
      %v586 = vpop.f32.mrf.mxu0
      %587 = vmatprep.mubr.f32.mxu0 0.0
      %588 = vmatmul.mubr.f32.gmra.mxu0 %v487
      %v589 = vpop.f32.mrf.mxu0
      %v590 = vadd.f32 %v458, %v589
      %v591 = vpop.f32.mrf.mxu0
      %592 = vmatprep.mubr.f32.mxu0 0.0
      %593 = vmatmul.mubr.f32.gmra.mxu0 %v490
      %v594 = vpop.f32.mrf.mxu0
      %v595 = vadd.f32 %v463, %v594
      %v596 = vpop.f32.mrf.mxu0
      %597 = vmatprep.mubr.f32.mxu0 0.0
      %598 = vmatmul.mubr.f32.gmra.mxu0 %v493
      %v599 = vpop.f32.mrf.mxu0
      %v600 = vadd.f32 %v468, %v599
      %v601 = vpop.f32.mrf.mxu0
      %602 = vdwg.mxu0
      %v603 = vld [vmem:[%s288 + $0x8] sm:$0xff]
      %v604 = vld [vmem:[%s288 + $0x10] sm:$0xff]
      %v605 = vld [vmem:[%s288 + $0x18] sm:$0xff]
      %v606 = vld [vmem:[%s288 + $0x20] sm:$0xff]
      %v607 = vld [vmem:[%s288 + $0x28] sm:$0xff]
      %v608 = vld [vmem:[%s288 + $0x30] sm:$0xff]
      %v609 = vld [vmem:[%s288 + $0x38] sm:$0xff]
      %v610 = vld [vmem:[%s288 + $0x40] sm:$0xff]
      %s611 = scalar_lea.vmem %s2, 48
      %v612 = vld [vmem:[%s611] sm:$0xff]
      %v613 = vld [vmem:[%s611 + $0x8] sm:$0xff]
      %v614 = vld [vmem:[%s611 + $0x10] sm:$0xf]
      %v616 = vsel %vm337, %v603, 0
      %v619 = vsel %vm337, %v604, 0
      %v622 = vsel %vm337, %v605, 0
      %v625 = vsel %vm337, %v606, 0
      %v628 = vsel %vm337, %v607, 0
      %v631 = vsel %vm337, %v608, 0
      %v634 = vsel %vm337, %v609, 0
      %v637 = vsel %vm337, %v610, 0
      %v640 = vsel %vm362, %v614, 0
      %642 = vmatprep.subr.mxu0 0.0
      %643 = vmatpush1.msra.mxu0 0.0
      %644 = vmatprep.subr.mxu0 0.0
      %645 = vmatpush1.msra.mxu0 0.0
      %646 = vmatprep.subr.mxu0 0.0
      %647 = vmatpush1.msra.mxu0 0.0
      %648 = vmatprep.subr.mxu0 0.0
      %649 = vmatpush1.msra.mxu0 0.0
      %650 = vmatprep.subr.mxu0 0.0
      %651 = vmatpush1.msra.mxu0 0.0
      %652 = vmatprep.subr.mxu0 0.0
      %653 = vmatpush1.msra.mxu0 0.0
      %654 = vmatprep.subr.mxu0 0.0
      %655 = vmatpush1.msra.mxu0 0.0
      %656 = vmatprep.subr.mxu0 0.0
      %657 = vmatpush1.msra.mxu0 0.0
      %658 = vmatprep.subr.mxu0 0.0
      %659 = vmatpush1.msra.mxu0 0.0
      %660 = vmatprep.subr.mxu0 0.0
      %661 = vmatpush1.msra.mxu0 0.0
      %662 = vmatprep.subr.mxu0 0.0
      %663 = vmatpush1.msra.mxu0 0.0
      %664 = vmatprep.subr.mxu0 0.0
      %665 = vmatpush1.msra.mxu0 0.0
      %666 = vmatprep.subr.mxu0 0.0
      %667 = vmatpush1.msra.mxu0 0.0
      %668 = vmatprep.subr.mxu0 0.0
      %669 = vmatpush1.msra.mxu0 %v640
      %670 = vmatprep.subr.mxu0 0.0
      %671 = vmatpush1.msra.mxu0 %v613
      %672 = vmatprep.subr.mxu0 0.0
      %673 = vmatpush1.msra.mxu0 %v612
      %674 = vmatprep.subr.mxu0 0.0
      %675 = vmatpush2.msra.mxu0 0.0
      %676 = vmatprep.subr.mxu0 0.0
      %677 = vmatpush2.msra.mxu0 0.0
      %678 = vmatprep.subr.mxu0 0.0
      %679 = vmatpush2.msra.mxu0 0.0
      %680 = vmatprep.subr.mxu0 0.0
      %681 = vmatpush2.msra.mxu0 0.0
      %682 = vmatprep.subr.mxu0 0.0
      %683 = vmatpush2.msra.mxu0 0.0
      %684 = vmatprep.subr.mxu0 0.0
      %685 = vmatpush2.msra.mxu0 0.0
      %686 = vmatprep.subr.mxu0 0.0
      %687 = vmatpush2.msra.mxu0 0.0
      %688 = vmatprep.subr.mxu0 0.0
      %689 = vmatpush2.msra.mxu0 0.0
      %690 = vmatprep.subr.mxu0 0.0
      %691 = vmatpush2.msra.mxu0 0.0
      %692 = vmatprep.subr.mxu0 0.0
      %693 = vmatpush2.msra.mxu0 0.0
      %694 = vmatprep.subr.mxu0 0.0
      %695 = vmatpush2.msra.mxu0 0.0
      %696 = vmatprep.subr.mxu0 0.0
      %697 = vmatpush2.msra.mxu0 0.0
      %698 = vmatprep.subr.mxu0 0.0
      %699 = vmatpush2.msra.mxu0 0.0
      %700 = vmatprep.subr.mxu0 0.0
      %701 = vmatpush2.msra.mxu0 0.0
      %702 = vmatprep.subr.mxu0 0.0
      %703 = vmatpush2.msra.mxu0 0.0
      %704 = vmatprep.subr.mxu0 0.0
      %705 = vmatpush2.msra.mxu0 0.0
      %706 = vmatprep.mubr.f32.mxu0 0.0
      %707 = vmatmul.mubr.f32.gmra.mxu0 %v616
      %v708 = vpop.f32.mrf.mxu0
      %v709 = vadd.f32 0.0, %v708
      %v710 = vpop.f32.mrf.mxu0
      %711 = vmatprep.mubr.f32.mxu0 0.0
      %712 = vmatmul.mubr.f32.gmra.mxu0 %v619
      %v713 = vpop.f32.mrf.mxu0
      %v714 = vadd.f32 0.0, %v713
      %v715 = vpop.f32.mrf.mxu0
      %716 = vmatprep.mubr.f32.mxu0 0.0
      %717 = vmatmul.mubr.f32.gmra.mxu0 %v622
      %v718 = vpop.f32.mrf.mxu0
      %v719 = vadd.f32 0.0, %v718
      %v720 = vpop.f32.mrf.mxu0
      %721 = vmatprep.mubr.f32.mxu0 0.0
      %722 = vmatmul.mubr.f32.gmra.mxu0 %v625
      %v723 = vpop.f32.mrf.mxu0
      %v724 = vadd.f32 0.0, %v723
      %v725 = vpop.f32.mrf.mxu0
      %726 = vmatprep.mubr.f32.mxu0 0.0
      %727 = vmatmul.mubr.f32.gmra.mxu0 %v628
      %v728 = vpop.f32.mrf.mxu0
      %v729 = vadd.f32 0.0, %v728
      %v730 = vpop.f32.mrf.mxu0
      %731 = vmatprep.mubr.f32.mxu0 0.0
      %732 = vmatmul.mubr.f32.gmra.mxu0 %v631
      %v733 = vpop.f32.mrf.mxu0
      %v734 = vadd.f32 0.0, %v733
      %v735 = vpop.f32.mrf.mxu0
      %736 = vmatprep.mubr.f32.mxu0 0.0
      %737 = vmatmul.mubr.f32.gmra.mxu0 %v634
      %v738 = vpop.f32.mrf.mxu0
      %v739 = vadd.f32 0.0, %v738
      %v740 = vpop.f32.mrf.mxu0
      %741 = vmatprep.mubr.f32.mxu0 0.0
      %742 = vmatmul.mubr.f32.gmra.mxu0 %v637
      %v743 = vpop.f32.mrf.mxu0
      %v744 = vadd.f32 0.0, %v743
      %v745 = vpop.f32.mrf.mxu0
      %746 = vdwg.mxu0
      %v747 = vadd.f32 %v565, %v709
      %v748 = vadd.f32 %v570, %v714
      %v749 = vadd.f32 %v575, %v719
      %v750 = vadd.f32 %v580, %v724
      %v751 = vadd.f32 %v585, %v729
      %v752 = vadd.f32 %v590, %v734
      %v753 = vadd.f32 %v595, %v739
      %v754 = vadd.f32 %v600, %v744
      %v755 = vld [vmem:[%s297 + $0x8] sm:$0xff]
      %v756 = vld [vmem:[%s297 + $0x10] sm:$0xff]
      %v757 = vld [vmem:[%s297 + $0x18] sm:$0xff]
      %v758 = vld [vmem:[%s297 + $0x20] sm:$0xff]
      %v759 = vld [vmem:[%s297 + $0x28] sm:$0xff]
      %v760 = vld [vmem:[%s297 + $0x30] sm:$0xff]
      %v761 = vld [vmem:[%s297 + $0x38] sm:$0xff]
      %v762 = vld [vmem:[%s297 + $0x40] sm:$0xff]
      %s763 = scalar_lea.vmem %s2, 72
      %v764 = vld [vmem:[%s763] sm:$0xff]
      %v765 = vld [vmem:[%s763 + $0x8] sm:$0xff]
      %v766 = vld [vmem:[%s763 + $0x10] sm:$0xf]
      %v768 = vsel %vm337, %v755, 0
      %v771 = vsel %vm337, %v756, 0
      %v774 = vsel %vm337, %v757, 0
      %v777 = vsel %vm337, %v758, 0
      %v780 = vsel %vm337, %v759, 0
      %v783 = vsel %vm337, %v760, 0
      %v786 = vsel %vm337, %v761, 0
      %v789 = vsel %vm337, %v762, 0
      %v792 = vsel %vm362, %v766, 0
      %794 = vmatprep.subr.mxu0 0.0
      %795 = vmatpush1.msra.mxu0 0.0
      %796 = vmatprep.subr.mxu0 0.0
      %797 = vmatpush1.msra.mxu0 0.0
      %798 = vmatprep.subr.mxu0 0.0
      %799 = vmatpush1.msra.mxu0 0.0
      %800 = vmatprep.subr.mxu0 0.0
      %801 = vmatpush1.msra.mxu0 0.0
      %802 = vmatprep.subr.mxu0 0.0
      %803 = vmatpush1.msra.mxu0 0.0
      %804 = vmatprep.subr.mxu0 0.0
      %805 = vmatpush1.msra.mxu0 0.0
      %806 = vmatprep.subr.mxu0 0.0
      %807 = vmatpush1.msra.mxu0 0.0
      %808 = vmatprep.subr.mxu0 0.0
      %809 = vmatpush1.msra.mxu0 0.0
      %810 = vmatprep.subr.mxu0 0.0
      %811 = vmatpush1.msra.mxu0 0.0
      %812 = vmatprep.subr.mxu0 0.0
      %813 = vmatpush1.msra.mxu0 0.0
      %814 = vmatprep.subr.mxu0 0.0
      %815 = vmatpush1.msra.mxu0 0.0
      %816 = vmatprep.subr.mxu0 0.0
      %817 = vmatpush1.msra.mxu0 0.0
      %818 = vmatprep.subr.mxu0 0.0
      %819 = vmatpush1.msra.mxu0 0.0
      %820 = vmatprep.subr.mxu0 0.0
      %821 = vmatpush1.msra.mxu0 %v792
      %822 = vmatprep.subr.mxu0 0.0
      %823 = vmatpush1.msra.mxu0 %v765
      %824 = vmatprep.subr.mxu0 0.0
      %825 = vmatpush1.msra.mxu0 %v764
      %826 = vmatprep.subr.mxu0 0.0
      %827 = vmatpush2.msra.mxu0 0.0
      %828 = vmatprep.subr.mxu0 0.0
      %829 = vmatpush2.msra.mxu0 0.0
      %830 = vmatprep.subr.mxu0 0.0
      %831 = vmatpush2.msra.mxu0 0.0
      %832 = vmatprep.subr.mxu0 0.0
      %833 = vmatpush2.msra.mxu0 0.0
      %834 = vmatprep.subr.mxu0 0.0
      %835 = vmatpush2.msra.mxu0 0.0
      %836 = vmatprep.subr.mxu0 0.0
      %837 = vmatpush2.msra.mxu0 0.0
      %838 = vmatprep.subr.mxu0 0.0
      %839 = vmatpush2.msra.mxu0 0.0
      %840 = vmatprep.subr.mxu0 0.0
      %841 = vmatpush2.msra.mxu0 0.0
      %842 = vmatprep.subr.mxu0 0.0
      %843 = vmatpush2.msra.mxu0 0.0
      %844 = vmatprep.subr.mxu0 0.0
      %845 = vmatpush2.msra.mxu0 0.0
      %846 = vmatprep.subr.mxu0 0.0
      %847 = vmatpush2.msra.mxu0 0.0
      %848 = vmatprep.subr.mxu0 0.0
      %849 = vmatpush2.msra.mxu0 0.0
      %850 = vmatprep.subr.mxu0 0.0
      %851 = vmatpush2.msra.mxu0 0.0
      %852 = vmatprep.subr.mxu0 0.0
      %853 = vmatpush2.msra.mxu0 0.0
      %854 = vmatprep.subr.mxu0 0.0
      %855 = vmatpush2.msra.mxu0 0.0
      %856 = vmatprep.subr.mxu0 0.0
      %857 = vmatpush2.msra.mxu0 0.0
      %858 = vmatprep.mubr.f32.mxu0 0.0
      %859 = vmatmul.mubr.f32.gmra.mxu0 %v768
      %v860 = vpop.f32.mrf.mxu0
      %v861 = vadd.f32 0.0, %v860
      %v862 = vpop.f32.mrf.mxu0
      %863 = vmatprep.mubr.f32.mxu0 0.0
      %864 = vmatmul.mubr.f32.gmra.mxu0 %v771
      %v865 = vpop.f32.mrf.mxu0
      %v866 = vadd.f32 0.0, %v865
      %v867 = vpop.f32.mrf.mxu0
      %868 = vmatprep.mubr.f32.mxu0 0.0
      %869 = vmatmul.mubr.f32.gmra.mxu0 %v774
      %v870 = vpop.f32.mrf.mxu0
      %v871 = vadd.f32 0.0, %v870
      %v872 = vpop.f32.mrf.mxu0
      %873 = vmatprep.mubr.f32.mxu0 0.0
      %874 = vmatmul.mubr.f32.gmra.mxu0 %v777
      %v875 = vpop.f32.mrf.mxu0
      %v876 = vadd.f32 0.0, %v875
      %v877 = vpop.f32.mrf.mxu0
      %878 = vmatprep.mubr.f32.mxu0 0.0
      %879 = vmatmul.mubr.f32.gmra.mxu0 %v780
      %v880 = vpop.f32.mrf.mxu0
      %v881 = vadd.f32 0.0, %v880
      %v882 = vpop.f32.mrf.mxu0
      %883 = vmatprep.mubr.f32.mxu0 0.0
      %884 = vmatmul.mubr.f32.gmra.mxu0 %v783
      %v885 = vpop.f32.mrf.mxu0
      %v886 = vadd.f32 0.0, %v885
      %v887 = vpop.f32.mrf.mxu0
      %888 = vmatprep.mubr.f32.mxu0 0.0
      %889 = vmatmul.mubr.f32.gmra.mxu0 %v786
      %v890 = vpop.f32.mrf.mxu0
      %v891 = vadd.f32 0.0, %v890
      %v892 = vpop.f32.mrf.mxu0
      %893 = vmatprep.mubr.f32.mxu0 0.0
      %894 = vmatmul.mubr.f32.gmra.mxu0 %v789
      %v895 = vpop.f32.mrf.mxu0
      %v896 = vadd.f32 0.0, %v895
      %v897 = vpop.f32.mrf.mxu0
      %898 = vdwg.mxu0
      %v899 = vadd.f32 %v747, %v861
      %v900 = vadd.f32 %v748, %v866
      %v901 = vadd.f32 %v749, %v871
      %v902 = vadd.f32 %v750, %v876
      %v903 = vadd.f32 %v751, %v881
      %v904 = vadd.f32 %v752, %v886
      %v905 = vadd.f32 %v753, %v891
      %v906 = vadd.f32 %v754, %v896
      %v907 = vld [vmem:[%s288 + $0x10] sm:$0xff]
      %v908 = vld [vmem:[%s288 + $0x18] sm:$0xff]
      %v909 = vld [vmem:[%s288 + $0x20] sm:$0xff]
      %v910 = vld [vmem:[%s288 + $0x28] sm:$0xff]
      %v911 = vld [vmem:[%s288 + $0x30] sm:$0xff]
      %v912 = vld [vmem:[%s288 + $0x38] sm:$0xff]
      %v913 = vld [vmem:[%s288 + $0x40] sm:$0xff]
      %v914 = vld [vmem:[%s288 + $0x48] sm:$0xff]
      %s915 = scalar_lea.vmem %s2, 96
      %v916 = vld [vmem:[%s915] sm:$0xff]
      %v917 = vld [vmem:[%s915 + $0x8] sm:$0xff]
      %v918 = vld [vmem:[%s915 + $0x10] sm:$0xf]
      %v920 = vsel %vm337, %v907, 0
      %v923 = vsel %vm337, %v908, 0
      %v926 = vsel %vm337, %v909, 0
      %v929 = vsel %vm337, %v910, 0
      %v932 = vsel %vm337, %v911, 0
      %v935 = vsel %vm337, %v912, 0
      %v938 = vsel %vm337, %v913, 0
      %v941 = vsel %vm337, %v914, 0
      %v944 = vsel %vm362, %v918, 0
      %946 = vmatprep.subr.mxu0 0.0
      %947 = vmatpush1.msra.mxu0 0.0
      %948 = vmatprep.subr.mxu0 0.0
      %949 = vmatpush1.msra.mxu0 0.0
      %950 = vmatprep.subr.mxu0 0.0
      %951 = vmatpush1.msra.mxu0 0.0
      %952 = vmatprep.subr.mxu0 0.0
      %953 = vmatpush1.msra.mxu0 0.0
      %954 = vmatprep.subr.mxu0 0.0
      %955 = vmatpush1.msra.mxu0 0.0
      %956 = vmatprep.subr.mxu0 0.0
      %957 = vmatpush1.msra.mxu0 0.0
      %958 = vmatprep.subr.mxu0 0.0
      %959 = vmatpush1.msra.mxu0 0.0
      %960 = vmatprep.subr.mxu0 0.0
      %961 = vmatpush1.msra.mxu0 0.0
      %962 = vmatprep.subr.mxu0 0.0
      %963 = vmatpush1.msra.mxu0 0.0
      %964 = vmatprep.subr.mxu0 0.0
      %965 = vmatpush1.msra.mxu0 0.0
      %966 = vmatprep.subr.mxu0 0.0
      %967 = vmatpush1.msra.mxu0 0.0
      %968 = vmatprep.subr.mxu0 0.0
      %969 = vmatpush1.msra.mxu0 0.0
      %970 = vmatprep.subr.mxu0 0.0
      %971 = vmatpush1.msra.mxu0 0.0
      %972 = vmatprep.subr.mxu0 0.0
      %973 = vmatpush1.msra.mxu0 %v944
      %974 = vmatprep.subr.mxu0 0.0
      %975 = vmatpush1.msra.mxu0 %v917
      %976 = vmatprep.subr.mxu0 0.0
      %977 = vmatpush1.msra.mxu0 %v916
      %978 = vmatprep.subr.mxu0 0.0
      %979 = vmatpush2.msra.mxu0 0.0
      %980 = vmatprep.subr.mxu0 0.0
      %981 = vmatpush2.msra.mxu0 0.0
      %982 = vmatprep.subr.mxu0 0.0
      %983 = vmatpush2.msra.mxu0 0.0
      %984 = vmatprep.subr.mxu0 0.0
      %985 = vmatpush2.msra.mxu0 0.0
      %986 = vmatprep.subr.mxu0 0.0
      %987 = vmatpush2.msra.mxu0 0.0
      %988 = vmatprep.subr.mxu0 0.0
      %989 = vmatpush2.msra.mxu0 0.0
      %990 = vmatprep.subr.mxu0 0.0
      %991 = vmatpush2.msra.mxu0 0.0
      %992 = vmatprep.subr.mxu0 0.0
      %993 = vmatpush2.msra.mxu0 0.0
      %994 = vmatprep.subr.mxu0 0.0
      %995 = vmatpush2.msra.mxu0 0.0
      %996 = vmatprep.subr.mxu0 0.0
      %997 = vmatpush2.msra.mxu0 0.0
      %998 = vmatprep.subr.mxu0 0.0
      %999 = vmatpush2.msra.mxu0 0.0
      %1000 = vmatprep.subr.mxu0 0.0
      %1001 = vmatpush2.msra.mxu0 0.0
      %1002 = vmatprep.subr.mxu0 0.0
      %1003 = vmatpush2.msra.mxu0 0.0
      %1004 = vmatprep.subr.mxu0 0.0
      %1005 = vmatpush2.msra.mxu0 0.0
      %1006 = vmatprep.subr.mxu0 0.0
      %1007 = vmatpush2.msra.mxu0 0.0
      %1008 = vmatprep.subr.mxu0 0.0
      %1009 = vmatpush2.msra.mxu0 0.0
      %1010 = vmatprep.mubr.f32.mxu0 0.0
      %1011 = vmatmul.mubr.f32.gmra.mxu0 %v920
      %v1012 = vpop.f32.mrf.mxu0
      %v1013 = vadd.f32 0.0, %v1012
      %v1014 = vpop.f32.mrf.mxu0
      %1015 = vmatprep.mubr.f32.mxu0 0.0
      %1016 = vmatmul.mubr.f32.gmra.mxu0 %v923
      %v1017 = vpop.f32.mrf.mxu0
      %v1018 = vadd.f32 0.0, %v1017
      %v1019 = vpop.f32.mrf.mxu0
      %1020 = vmatprep.mubr.f32.mxu0 0.0
      %1021 = vmatmul.mubr.f32.gmra.mxu0 %v926
      %v1022 = vpop.f32.mrf.mxu0
      %v1023 = vadd.f32 0.0, %v1022
      %v1024 = vpop.f32.mrf.mxu0
      %1025 = vmatprep.mubr.f32.mxu0 0.0
      %1026 = vmatmul.mubr.f32.gmra.mxu0 %v929
      %v1027 = vpop.f32.mrf.mxu0
      %v1028 = vadd.f32 0.0, %v1027
      %v1029 = vpop.f32.mrf.mxu0
      %1030 = vmatprep.mubr.f32.mxu0 0.0
      %1031 = vmatmul.mubr.f32.gmra.mxu0 %v932
      %v1032 = vpop.f32.mrf.mxu0
      %v1033 = vadd.f32 0.0, %v1032
      %v1034 = vpop.f32.mrf.mxu0
      %1035 = vmatprep.mubr.f32.mxu0 0.0
      %1036 = vmatmul.mubr.f32.gmra.mxu0 %v935
      %v1037 = vpop.f32.mrf.mxu0
      %v1038 = vadd.f32 0.0, %v1037
      %v1039 = vpop.f32.mrf.mxu0
      %1040 = vmatprep.mubr.f32.mxu0 0.0
      %1041 = vmatmul.mubr.f32.gmra.mxu0 %v938
      %v1042 = vpop.f32.mrf.mxu0
      %v1043 = vadd.f32 0.0, %v1042
      %v1044 = vpop.f32.mrf.mxu0
      %1045 = vmatprep.mubr.f32.mxu0 0.0
      %1046 = vmatmul.mubr.f32.gmra.mxu0 %v941
      %v1047 = vpop.f32.mrf.mxu0
      %v1048 = vadd.f32 0.0, %v1047
      %v1049 = vpop.f32.mrf.mxu0
      %1050 = vdwg.mxu0
      %v1051 = vadd.f32 %v899, %v1013
      %v1052 = vadd.f32 %v900, %v1018
      %v1053 = vadd.f32 %v901, %v1023
      %v1054 = vadd.f32 %v902, %v1028
      %v1055 = vadd.f32 %v903, %v1033
      %v1056 = vadd.f32 %v904, %v1038
      %v1057 = vadd.f32 %v905, %v1043
      %v1058 = vadd.f32 %v906, %v1048
      %v1059 = vld [vmem:[%s3] sm:$0x1]
      %v1061 = vlaneseq
      %v1062 = vshrl.u32 %v1061, 7
      %v1063 = vsub.s32 0, %v1062
      %v1064 = vrot.slane %v1059, %v1063
      %v1066 = vadd.f32 %v1051, %v1064
      %v1067 = vadd.f32 %v1052, %v1064
      %v1068 = vadd.f32 %v1053, %v1064
      %v1069 = vadd.f32 %v1054, %v1064
      %v1070 = vadd.f32 %v1055, %v1064
      %v1071 = vadd.f32 %v1056, %v1064
      %v1072 = vadd.f32 %v1057, %v1064
      %v1073 = vadd.f32 %v1058, %v1064
      %v1074 = vmax.f32 %v1066, 0.0
      %v1075 = vmax.f32 %v1067, 0.0
      %v1076 = vmax.f32 %v1068, 0.0
      %v1077 = vmax.f32 %v1069, 0.0
      %v1078 = vmax.f32 %v1070, 0.0
      %v1079 = vmax.f32 %v1071, 0.0
      %v1080 = vmax.f32 %v1072, 0.0
      %v1081 = vmax.f32 %v1073, 0.0
      %1082 = vst [vmem:[%s306] sm:$0xff] %v1074
      %1083 = vst [vmem:[%s306 + $0x8] sm:$0xff] %v1075
      %1084 = vst [vmem:[%s306 + $0x10] sm:$0xff] %v1076
      %1085 = vst [vmem:[%s306 + $0x18] sm:$0xff] %v1077
      %1086 = vst [vmem:[%s306 + $0x20] sm:$0xff] %v1078
      %1087 = vst [vmem:[%s306 + $0x28] sm:$0xff] %v1079
      %1088 = vst [vmem:[%s306 + $0x30] sm:$0xff] %v1080
      %1089 = vst [vmem:[%s306 + $0x38] sm:$0xff] %v1081
      %v1090 = vadd.f32 %v1074, %v1075
      %v1091 = vadd.f32 %v1090, %v1076
      %v1092 = vadd.f32 %v1091, %v1077
      %v1093 = vadd.f32 %v1092, %v1078
      %v1094 = vadd.f32 %v1093, %v1079
      %v1095 = vadd.f32 %v1094, %v1080
      %v1096 = vadd.f32 %v1095, %v1081
      %v1097 = vrot.slane %v1096, 4
      %v1098 = vadd.f32 %v1096, %v1097
      %v1099 = vrot.slane %v1098, 2
      %v1100 = vadd.f32 %v1098, %v1099
      %v1101 = vrot.slane %v1100, 1
      %v1102 = vadd.f32 %v1100, %v1101
      %1103 = vst [vmem:[%s313] sm:$0x1] %v1102
      %v1104 = vmul.f32 %v1074, %v1074
      %v1105 = vmul.f32 %v1075, %v1075
      %v1106 = vmul.f32 %v1076, %v1076
      %v1107 = vmul.f32 %v1077, %v1077
      %v1108 = vmul.f32 %v1078, %v1078
      %v1109 = vmul.f32 %v1079, %v1079
      %v1110 = vmul.f32 %v1080, %v1080
      %v1111 = vmul.f32 %v1081, %v1081
      %v1112 = vadd.f32 %v1104, %v1105
      %v1113 = vadd.f32 %v1112, %v1106
      %v1114 = vadd.f32 %v1113, %v1107
      %v1115 = vadd.f32 %v1114, %v1108
      %v1116 = vadd.f32 %v1115, %v1109
      %v1117 = vadd.f32 %v1116, %v1110
      %v1118 = vadd.f32 %v1117, %v1111
      %v1119 = vrot.slane %v1118, 4
      %v1120 = vadd.f32 %v1118, %v1119
      %v1121 = vrot.slane %v1120, 2
      %v1122 = vadd.f32 %v1120, %v1121
      %v1123 = vrot.slane %v1122, 1
      %v1124 = vadd.f32 %v1122, %v1123
      %1125 = vst [vmem:[%s313 + $0x1] sm:$0x1] %v1124
      %p1126 = scmp.lt.s32.totalorder %s21, 1
      %s1127 = scalar_select %p1126, %s21, 1
      %p1128 = scmp.lt.s32.totalorder %s22, 0
      %s1129 = scalar_select %p1128, %s22, 0
      %s1130 = smul.addr %s1129, 8
      %s1131 = smul.addr %s1127, 8
      %s1132 = sadd.s32 %s1130, %s1131
      %s1133 = smul.addr %s1132, 8
      %s1134 = scalar_lea.vmem %s4, %s1133
      %p1135 = scmp.lt.s32.totalorder %s21, 1
      %s1136 = scalar_select %p1135, %s21, 1
      %p1137 = scmp.lt.s32.totalorder %s22, 0
      %s1138 = scalar_select %p1137, %s22, 0
      %s1139 = sadd.s32 %s1138, %s1136
      %s1140 = smul.addr %s1139, 2
      %s1141 = scalar_lea.vmem %s5, %s1140
      // Predicated region
      $region37: #{reduction_cell.1} parent=35 // pred_check
        %p1142 = pneg %p147
      $region38: #{reduction_cell.1} parent=35 // pred_check_branch
        %1144 = sbr.rel (%p1142) target = $region40
      $region39: #{reduction_cell.1} parent=35 // pred_region
        _
      $region40: #{reduction_cell.1} parent=35 // pred_fallthru
        _
      // Predicated region
      $region41: #{reduction_cell.1} parent=35 // pred_check
        %p1145 = pneg %p175
      $region42: #{reduction_cell.1} parent=35 // pred_check_branch
        %1147 = sbr.rel (%p1145) target = $region44
      $region43: #{reduction_cell.1} parent=35 // pred_region
        _
      $region44: #{reduction_cell.1} parent=35 // pred_fallthru
        _
    $region36: #{reduction_cell.1} parent=5 // pred_fallthru
      _
    %p1148 = scmp.le.s32.totalorder 2, %s12
    // Predicated region
    $region45: #{reduction_cell.1} parent=5 // pred_check
      %p1149 = pneg %p1148
    $region46: #{reduction_cell.1} parent=5 // pred_check_branch
      %1151 = sbr.rel (%p1149) target = $region48
    $region47: #{reduction_cell.1} parent=5 // pred_region
      %s1152 = ssub.s32 %s12, 2
      // Predicated region
      $region49: #{reduction_cell.1} parent=47 // pred_check
        %p1153 = pneg %p153
      $region50: #{reduction_cell.1} parent=47 // pred_check_branch
        %1155 = sbr.rel (%p1153) target = $region52
      $region51: #{reduction_cell.1} parent=47 // pred_region
        %p1156 = scmp.lt.s32.totalorder %s23, 1
        %s1157 = scalar_select %p1156, %s23, 1
        %p1158 = scmp.lt.s32.totalorder %s24, 0
        %s1159 = scalar_select %p1158, %s24, 0
        %s1160 = smul.addr %s1159, 8
        %s1161 = smul.addr %s1157, 8
        %s1162 = sadd.s32 %s1160, %s1161
        %s1163 = smul.addr %s1162, 8
        %s1164 = scalar_lea.vmem %s4, %s1163
      $region52: #{reduction_cell.1} parent=47 // pred_fallthru
        _
      // Predicated region
      $region53: #{reduction_cell.1} parent=47 // pred_check
        %p1165 = pneg %p181
      $region54: #{reduction_cell.1} parent=47 // pred_check_branch
        %1167 = sbr.rel (%p1165) target = $region56
      $region55: #{reduction_cell.1} parent=47 // pred_region
        %p1168 = scmp.lt.s32.totalorder %s23, 1
        %s1169 = scalar_select %p1168, %s23, 1
        %p1170 = scmp.lt.s32.totalorder %s24, 0
        %s1171 = scalar_select %p1170, %s24, 0
        %s1172 = sadd.s32 %s1171, %s1169
        %s1173 = smul.addr %s1172, 2
        %s1174 = scalar_lea.vmem %s5, %s1173
      $region56: #{reduction_cell.1} parent=47 // pred_fallthru
        _
    $region48: #{reduction_cell.1} parent=5 // pred_fallthru
      _
  $region6: #{reduction_cell.1} parent=0 // loop_footer
    %s16 = sadd.s32 1, %s12
  $region7: #{reduction_cell.1} parent=0 // loop_footer_branch
    %11 = sbr.rel target = $region3
  $region8: #{reduction_cell.1} parent=0 // loop_exit
    _

</llo_original>
